<compile_context>
chip_gen: v7x
topology: tpu7x:2x2x1
jax: 0.10.0
libtpu: 0.0.40
codegen_flags: <defaults>
</compile_context>

<pallas_src>
import functools

import jax
import jax.numpy as jnp
from jax import lax
from jax.experimental import pallas as pl
from jax.experimental.pallas import tpu as pltpu

GAMMA = 1.5
ALPHA = 0.25

LANES = 128
SUBLANES = 8
DEFAULT_CHUNK_ROWS = 64          # rows per inner-loop chunk (review: 64-128)


def _round_up(x, m):
    return ((x + m - 1) // m) * m


def _sublane_multiple(*dtypes):
    """Native sublane tile multiple for the given input dtypes (8/16/32)."""
    m = 8
    for dt in dtypes:
        m = max(m, 32 // max(1, jnp.dtype(dt).itemsize))
    return m


def _default_rows_per_tile():
    """Generation-aware row-tile size (bigger tiles amortize ~0.35us/step)."""
    try:
        vmem = pltpu.get_tpu_info().vmem_capacity_bytes
        if vmem >= 96 * 1024 * 1024:
            return 4096          # v5e / v6e: 128 MiB VMEM
        return 2048              # v7x: 64 MiB VMEM
    except Exception:            # pragma: no cover - conservative fallback
        return 2048


def _focal_loss_kernel(pred_ref, true_ref, out_ref, *,
                       gamma, alpha, chunk_rows, valid_elems_last,
                       approx_sigmoid):
    i = pl.program_id(0)
    n = pl.num_programs(0)

    rows_per_tile = pred_ref.shape[0]
    n_chunks = rows_per_tile // chunk_rows
    elems_per_tile = rows_per_tile * LANES

    one_m_alpha = 1.0 - alpha
    two_alpha_m1 = 2.0 * alpha - 1.0

    def chunk_loss(x, t):
        # x, t: (chunk_rows, LANES) float32, live in vregs (chunk is small).
        e = jnp.exp(-jnp.abs(x))                      # shared by BCE and sigmoid
        bce = jnp.maximum(x, 0.0) - x * t + jnp.log1p(e)
        num = jnp.where(x >= 0.0, 1.0, e)             # sigmoid without a 2nd exp
        den = 1.0 + e
        if approx_sigmoid:
            p = num * pl.reciprocal(den, approx=True)  # single EUP vrcp issue
        else:
            p = num / den
        # 1 - p_t == p + t - 2*t*p ; alpha_factor == (1-a) + t*(2a-1)  (exact
        # algebra, also correct for soft / label-smoothed targets).
        tp = t * p
        u = (p + t) - 2.0 * tp
        alpha_factor = one_m_alpha + two_alpha_m1 * t
        if gamma == 1.5:                              # default: avoid pow (log+exp)
            mf = u * jnp.sqrt(u)
        elif gamma == 2.0:
            mf = u * u
        elif gamma == 1.0:
            mf = u
        elif gamma == 0.0:
            mf = jnp.ones_like(u)
        else:
            mf = u ** gamma
        return bce * alpha_factor * mf

    def fold(vals):
        # Fold (chunk_rows, 128) into an (8, 128) vector partial with VPU adds.
        return vals.reshape(chunk_rows // SUBLANES, SUBLANES, LANES).sum(axis=0)

    def make_body(masked):
        def body(c, acc):
            r0 = pl.multiple_of(c * chunk_rows, chunk_rows)
            x = pred_ref[pl.ds(r0, chunk_rows), :].astype(jnp.float32)
            t = true_ref[pl.ds(r0, chunk_rows), :].astype(jnp.float32)
            loss = chunk_loss(x, t)
            if masked:
                # Flat index *within the tile* (fits i32); zeroes both the
                # ragged Pallas rows and the <128-element lane-pad tail, so
                # pad values never matter (robust for any gamma).
                row = lax.broadcasted_iota(jnp.int32, loss.shape, 0)
                lane = lax.broadcasted_iota(jnp.int32, loss.shape, 1)
                idx = (r0 + row) * LANES + lane
                loss = jnp.where(idx < valid_elems_last, loss, 0.0)
            return acc + fold(loss)
        return body

    zero = jnp.zeros((SUBLANES, LANES), jnp.float32)

    if valid_elems_last == elems_per_tile:
        # Every tile is fully valid: no masking anywhere.
        out_ref[0] = lax.fori_loop(0, n_chunks, make_body(False), zero,
                                   unroll=True)
    else:
        @pl.when(i < n - 1)
        def _():
            out_ref[0] = lax.fori_loop(0, n_chunks, make_body(False), zero,
                                       unroll=True)

        @pl.when(i == n - 1)
        def _():
            out_ref[0] = lax.fori_loop(0, n_chunks, make_body(True), zero,
                                       unroll=True)


def focal_loss(pred, true, gamma=GAMMA, alpha=ALPHA, *,
               reduction="mean",
               max_rows_per_tile=None,
               chunk_rows=DEFAULT_CHUNK_ROWS,
               approx_sigmoid=True):
    """FocalLoss(nn.BCEWithLogitsLoss(reduction=reduction), gamma, alpha)(pred, true)."""
    assert pred.shape == true.shape
    total = int(pred.size)
    assert total > 0
    if reduction not in ("mean", "sum"):
        # TODO(synk): reduction='none' would need a full-size elementwise output.
        raise NotImplementedError("only 'mean' and 'sum' reductions supported")

    if max_rows_per_tile is None:
        max_rows_per_tile = _default_rows_per_tile()
    assert max_rows_per_tile % SUBLANES == 0 and max_rows_per_tile >= SUBLANES

    # bf16 / f16 inputs are passed through untouched (kernel upcasts per chunk).
    flat_pred = pred.reshape(-1)
    flat_true = true.reshape(-1)

    # Tail pad only when total is not a multiple of the 128-lane width; padded
    # elements are masked by index in-kernel, so the pad values are irrelevant.
    # (See module docstring TODO about removing this copy entirely.)
    rem = total % LANES
    if rem:
        pad = LANES - rem
        flat_pred = jnp.pad(flat_pred, (0, pad))
        flat_true = jnp.pad(flat_true, (0, pad))

    rows = flat_pred.size // LANES
    pred2d = flat_pred.reshape(rows, LANES)
    true2d = flat_true.reshape(rows, LANES)

    # Tile geometry: rows_per_tile is a multiple of the dtype's sublane tiling
    # and of the inner chunk size; ragged row-tiles are masked on the last step.
    m = _sublane_multiple(pred.dtype, true.dtype)
    chunk = int(chunk_rows)
    if chunk % m:
        chunk = _round_up(chunk, m)
    rows_per_tile = min(int(max_rows_per_tile), _round_up(rows, m))
    if rows_per_tile <= chunk:
        chunk = rows_per_tile                  # small input: single-chunk tiles
    else:
        rows_per_tile = _round_up(rows_per_tile, chunk)

    n_tiles = pl.cdiv(rows, rows_per_tile)
    valid_elems_last = total - (n_tiles - 1) * rows_per_tile * LANES

    kernel = functools.partial(
        _focal_loss_kernel,
        gamma=float(gamma),
        alpha=float(alpha),
        chunk_rows=int(chunk),
        valid_elems_last=int(valid_elems_last),
        approx_sigmoid=bool(approx_sigmoid),
    )

    # Each grid step writes its own lane-dense (8,128) partial block, so the
    # row-tile axis is "parallel" (sharded across TensorCores on v7x).
    # TODO(synk): if the trace shows exposed DMA, add pipeline_mode=pl.Buffered(3)
    # to the two input BlockSpecs (costs one extra tile of VMEM per input).
    partials = pl.pallas_call(
        kernel,
        out_shape=jax.ShapeDtypeStruct((n_tiles, SUBLANES, LANES), jnp.float32),
        grid_spec=pltpu.PrefetchScalarGridSpec(
            num_scalar_prefetch=0,
            grid=(n_tiles,),
            in_specs=[
                pl.BlockSpec((rows_per_tile, LANES), lambda i: (i, 0)),
                pl.BlockSpec((rows_per_tile, LANES), lambda i: (i, 0)),
            ],
            out_specs=pl.BlockSpec((1, SUBLANES, LANES), lambda i: (i, 0, 0)),
        ),
        compiler_params=pltpu.CompilerParams(
            dimension_semantics=("parallel",),
        ),
    )(pred2d, true2d)

    # Tiny cross-tile reduction (n_tiles*1024 floats) finishes in JAX.
    s = jnp.sum(partials)
    if reduction == "sum":
        return s
    return s * (1.0 / total)


def _focal_loss_ref(pred, true, gamma=GAMMA, alpha=ALPHA):
    x = pred.astype(jnp.float32)
    t = true.astype(jnp.float32)
    bce = jnp.maximum(x, 0.0) - x * t + jnp.log1p(jnp.exp(-jnp.abs(x)))
    p = jax.nn.sigmoid(x)
    p_t = t * p + (1.0 - t) * (1.0 - p)
    af = t * alpha + (1.0 - t) * (1.0 - alpha)
    mf = (1.0 - p_t) ** gamma
    return jnp.mean(bce * af * mf)


if __name__ == "__main__":
    key = jax.random.PRNGKey(0)
    k1, k2, k3, k4 = jax.random.split(key, 4)

    # NCHW like the PyTorch module would receive (per-anchor objectness map).
    pred = jax.random.normal(k1, (2, 4, 16, 16), dtype=jnp.float32)
    true = jax.random.bernoulli(k2, p=0.3, shape=(2, 4, 16, 16)).astype(jnp.float32)

    ref = _focal_loss_ref(pred, true)

    # Default (approx EUP reciprocal in the sigmoid): slightly looser tolerance.
    out = jax.block_until_ready(focal_loss(pred, true))
    assert jnp.allclose(out, ref, rtol=5e-3, atol=1e-5), (out, ref)

    # Exact-divide path matches tightly.
    out_exact = jax.block_until_ready(focal_loss(pred, true, approx_sigmoid=False))
    assert jnp.allclose(out_exact, ref, rtol=1e-5, atol=1e-6), (out_exact, ref)

    # Multi-tile path (same data, tiny tiles).
    out_mt = jax.block_until_ready(focal_loss(pred, true, max_rows_per_tile=8))
    assert jnp.allclose(out_mt, ref, rtol=5e-3, atol=1e-5), (out_mt, ref)

    # Lane tail-pad + ragged last row-tile masking:
    # 2*5*163 = 1630 elements -> 13 rows of 128 lanes, last row partially valid.
    pred2 = jax.random.normal(k3, (2, 5, 163), dtype=jnp.float32)
    true2 = jax.random.bernoulli(k4, p=0.3, shape=(2, 5, 163)).astype(jnp.float32)
    ref2 = _focal_loss_ref(pred2, true2)
    out2 = jax.block_until_ready(focal_loss(pred2, true2, max_rows_per_tile=8))
    assert jnp.allclose(out2, ref2, rtol=5e-3, atol=1e-5), (out2, ref2)

    # bf16 inputs pass through untouched (kernel upcasts per chunk in VMEM).
    pred_bf = pred.astype(jnp.bfloat16)
    true_bf = true.astype(jnp.bfloat16)
    ref_bf = _focal_loss_ref(pred_bf, true_bf)
    out_bf = jax.block_until_ready(focal_loss(pred_bf, true_bf))
    assert jnp.allclose(out_bf, ref_bf, rtol=1e-2, atol=1e-4), (out_bf, ref_bf)

    print("KERNEL_OK")
</pallas_src>

<mosaic_0001>
module attributes {stable_mosaic.version = 11 : i64} {
  func.func @_focal_loss_kernel(%arg0: i32, %arg1: memref<16x128xf32, #tpu.memory_space<vmem>>, %arg2: memref<16x128xf32, #tpu.memory_space<vmem>>, %arg3: memref<1x8x128xf32, #tpu.memory_space<vmem>>) attributes {dimension_semantics = [#tpu.dimension_semantics<parallel>], iteration_bounds = array<i64: 1>, scalar_prefetch = 0 : i64, scratch_operands = 0 : i64, tpu.core_type = #tpu.core_type<tc>, window_params = [{transform_indices = @transform_0, window_bounds = array<i64: 16, 128>}, {transform_indices = @transform_1, window_bounds = array<i64: 16, 128>}, {transform_indices = @transform_2, window_bounds = array<i64: 1, 8, 128>}]} {
    %cst = arith.constant 0.000000e+00 : f32
    %0 = vector.broadcast %cst : f32 to vector<8x128xf32>
    %c0_i32 = arith.constant 0 : i32
    %c16_i32 = arith.constant 16 : i32
    %1 = arith.muli %c0_i32, %c16_i32 : i32
    %2 = tpu.assume_multiple %1, 16 : i32
    %3 = arith.index_cast %2 : i32 to index
    %c0 = arith.constant 0 : index
    %4 = vector.load %arg1[%3, %c0] : memref<16x128xf32, #tpu.memory_space<vmem>>, vector<16x128xf32>
    %5 = arith.index_cast %2 : i32 to index
    %c0_0 = arith.constant 0 : index
    %6 = vector.load %arg2[%5, %c0_0] : memref<16x128xf32, #tpu.memory_space<vmem>>, vector<16x128xf32>
    %7 = math.absf %4 : vector<16x128xf32>
    %cst_1 = arith.constant 0.000000e+00 : f32
    %8 = vector.broadcast %cst_1 : f32 to vector<16x128xf32>
    %9 = arith.subf %8, %7 : vector<16x128xf32>
    %10 = math.exp %9 : vector<16x128xf32>
    %cst_2 = arith.constant 0.000000e+00 : f32
    %11 = vector.broadcast %cst_2 : f32 to vector<16x128xf32>
    %12 = arith.maximumf %4, %11 : vector<16x128xf32>
    %13 = arith.mulf %4, %6 : vector<16x128xf32>
    %14 = arith.subf %12, %13 : vector<16x128xf32>
    %15 = math.log1p %10 : vector<16x128xf32>
    %16 = arith.addf %14, %15 : vector<16x128xf32>
    %cst_3 = arith.constant 0.000000e+00 : f32
    %17 = vector.broadcast %cst_3 : f32 to vector<16x128xf32>
    %18 = arith.cmpf oge, %4, %17 : vector<16x128xf32>
    %cst_4 = arith.constant 1.000000e+00 : f32
    %19 = vector.broadcast %cst_4 : f32 to vector<16x128xf32>
    %20 = arith.select %18, %19, %10 : vector<16x128xi1>, vector<16x128xf32>
    %cst_5 = arith.constant 1.000000e+00 : f32
    %21 = vector.broadcast %cst_5 : f32 to vector<16x128xf32>
    %22 = arith.addf %21, %10 : vector<16x128xf32>
    %23 = tpu.reciprocal %22 {approx = true} : vector<16x128xf32> -> vector<16x128xf32>
    %24 = arith.mulf %20, %23 : vector<16x128xf32>
    %25 = arith.mulf %6, %24 : vector<16x128xf32>
    %26 = arith.addf %24, %6 : vector<16x128xf32>
    %cst_6 = arith.constant 2.000000e+00 : f32
    %27 = vector.broadcast %cst_6 : f32 to vector<16x128xf32>
    %28 = arith.mulf %27, %25 : vector<16x128xf32>
    %29 = arith.subf %26, %28 : vector<16x128xf32>
    %cst_7 = arith.constant -5.000000e-01 : f32
    %30 = vector.broadcast %cst_7 : f32 to vector<16x128xf32>
    %31 = arith.mulf %30, %6 : vector<16x128xf32>
    %cst_8 = arith.constant 7.500000e-01 : f32
    %32 = vector.broadcast %cst_8 : f32 to vector<16x128xf32>
    %33 = arith.addf %32, %31 : vector<16x128xf32>
    %34 = math.sqrt %29 : vector<16x128xf32>
    %35 = arith.mulf %29, %34 : vector<16x128xf32>
    %36 = arith.mulf %16, %33 : vector<16x128xf32>
    %37 = arith.mulf %36, %35 : vector<16x128xf32>
    %38 = vector.shape_cast %37 : vector<16x128xf32> to vector<2x8x128xf32>
    %cst_9 = arith.constant dense<0.000000e+00> : vector<8x128xf32>
    %39 = vector.multi_reduction <add>, %38, %cst_9 [0] : vector<2x8x128xf32> to vector<8x128xf32>
    %40 = arith.addf %0, %39 : vector<8x128xf32>
    %c1_i32 = arith.constant 1 : i32
    %c0_10 = arith.constant 0 : index
    %c0_11 = arith.constant 0 : index
    %c0_12 = arith.constant 0 : index
    %41 = vector.load %arg3[%c0_10, %c0_11, %c0_12] : memref<1x8x128xf32, #tpu.memory_space<vmem>>, vector<1x8x128xf32>
    %42 = vector.shape_cast %41 : vector<1x8x128xf32> to vector<8x128xf32>
    %43 = vector.shape_cast %40 : vector<8x128xf32> to vector<1x8x128xf32>
    tpu.vector_store %arg3[%c0_10, %c0_11, %c0_12], %43 {strides = array<i32>} : memref<1x8x128xf32, #tpu.memory_space<vmem>>, vector<1x8x128xf32>,
    return
  }
  func.func @transform_0(%arg0: i32) -> (i32, i32) {
    %c0_i32 = arith.constant 0 : i32
    %c0_i32_0 = arith.constant 0 : i32
    return %arg0, %c0_i32 : i32, i32
  }
  func.func @transform_1(%arg0: i32) -> (i32, i32) {
    %c0_i32 = arith.constant 0 : i32
    %c0_i32_0 = arith.constant 0 : i32
    return %arg0, %c0_i32 : i32, i32
  }
  func.func @transform_2(%arg0: i32) -> (i32, i32, i32) {
    %c0_i32 = arith.constant 0 : i32
    %c0_i32_0 = arith.constant 0 : i32
    %c0_i32_1 = arith.constant 0 : i32
    return %arg0, %c0_i32, %c0_i32_0 : i32, i32, i32
  }
}

</mosaic_0001>

<llo_original>
// kernel: tpu_custom_call.1
$region0: #{tpu_custom_call.1}
  #allocation0 [shape = 'u32[]', space=smem, size = 0x4, offset = 0x4, fixed_abs, tag = 'smem constant byte address 0x4 - core index']
  #allocation1 [shape = 'u32[144,128]{1,0:T(1,128)}', space=vmem, size = 0x12000, scoped, tag = 'internal scratch']
  %s0 = inlined_call_operand.hbm [shape: f32[16,128], index: 0, kind: input, shape index: {}]
  %s1 = inlined_call_operand.hbm [shape: f32[16,128], index: 1, kind: input, shape index: {}]
  %s2 = inlined_call_operand.hbm [shape: f32[1,8,128], index: 2, kind: output, shape index: {}]
  %s3 = sld [smem:[#allocation0]]
  $region26: #{tpu_custom_call.1} parent=0
    _
  %s5 = ssub.s32 1, %s3
  %s6 = scalar_select 0, %s5, %s3
  $region1: #{tpu_custom_call.1} parent=0
    #allocation2 [shape = 'u8[8192]{0}', space=vmem, size = 0x2000, scoped, tag = 'input window, operand 0, single buffered']
    #allocation3 [shape = 's32[1]{0}', space=sflag, size = 0x4, scoped, tag = 'scoped memory for tpu_custom_call.1']
    #allocation4 [shape = 's32[1]{0}', space=sflag, size = 0x4, scoped, tag = 'scoped memory for tpu_custom_call.1']
    #allocation5 [shape = 'u8[8192]{0}', space=vmem, size = 0x2000, scoped, tag = 'input window, operand 1, single buffered']
    #allocation6 [shape = 's32[1]{0}', space=sflag, size = 0x4, scoped, tag = 'scoped memory for tpu_custom_call.1']
    #allocation7 [shape = 'u8[4096]{0}', space=vmem, size = 0x1000, scoped, tag = 'output window, operand 0, single buffered']
    %7 = vsyncpa [#allocation3], 0
    %8 = vsyncpa [#allocation6], 0
    %9 = vsyncpa [#allocation4], 0
    // Predicated region
    $region2: #{tpu_custom_call.1} parent=1 // pred_check
      _
    $region3: #{tpu_custom_call.1} parent=1 // pred_check_branch
      %11 = sbr.rel (0) target = $region5
    $region4: #{tpu_custom_call.1} parent=1 // pred_region
      %s13 = ssub.s32 256, 256
      %14 = vsyncadd [#allocation3], %s13
      %s15 = sshll.u32 [#allocation2], 4
      %s16 = int_to_ptr.vmem [resolvable:$true] %s15
      %21 = dma.hbm_to_vmem [thread:$0]  %s0, 256, %s16, [#allocation3], 128, 128, 8
    $region5: #{tpu_custom_call.1} parent=1 // pred_fallthru
      _
    // Predicated region
    $region6: #{tpu_custom_call.1} parent=1 // pred_check
      _
    $region7: #{tpu_custom_call.1} parent=1 // pred_check_branch
      %23 = sbr.rel (0) target = $region9
    $region8: #{tpu_custom_call.1} parent=1 // pred_region
      %s25 = ssub.s32 256, 256
      %26 = vsyncadd [#allocation6], %s25
      %s27 = sshll.u32 [#allocation5], 4
      %s28 = int_to_ptr.vmem [resolvable:$true] %s27
      %33 = dma.hbm_to_vmem [thread:$0]  %s1, 256, %s28, [#allocation6], 128, 128, 8
    $region9: #{tpu_custom_call.1} parent=1 // pred_fallthru
      _
    // Predicated region
    $region10: #{tpu_custom_call.1} parent=1 // pred_check
      _
    $region11: #{tpu_custom_call.1} parent=1 // pred_check_branch
      %35 = sbr.rel (0) target = $region13
    $region12: #{tpu_custom_call.1} parent=1 // pred_region
      %36 = dma.done [#allocation3], 256
    $region13: #{tpu_custom_call.1} parent=1 // pred_fallthru
      _
    // Predicated region
    $region14: #{tpu_custom_call.1} parent=1 // pred_check
      _
    $region15: #{tpu_custom_call.1} parent=1 // pred_check_branch
      %38 = sbr.rel (0) target = $region17
    $region16: #{tpu_custom_call.1} parent=1 // pred_region
      %39 = dma.done [#allocation6], 256
    $region17: #{tpu_custom_call.1} parent=1 // pred_fallthru
      _
    %v40 = vld [vmem:[#allocation2] sm:$0xff]
    %v41 = vld [vmem:[#allocation2 + $0x8] sm:$0xff]
    %v42 = vld [vmem:[#allocation5] sm:$0xff]
    %v43 = vld [vmem:[#allocation5 + $0x8] sm:$0xff]
    %v44 = vand.u32 2147483647, %v40
    %v45 = vand.u32 2147483647, %v41
    %v46 = vsub.f32 0.0, %v44
    %v47 = vsub.f32 0.0, %v45
    %v48 = vmul.f32 %v46, 1.442695
    %v49 = vpow.pop %v48
    %v50 = vmul.f32 %v47, 1.442695
    %v51 = vpow.pop %v50
    %v52 = vmax.f32 %v40, 0.0
    %v53 = vmax.f32 %v41, 0.0
    %v54 = vmul.f32 %v40, %v42
    %v55 = vmul.f32 %v41, %v43
    %v56 = vsub.f32 %v52, %v54
    %v57 = vsub.f32 %v53, %v55
    %v58 = vadd.f32 %v49, 1.0
    %v59 = vlog2.pop %v58
    %v60 = vmul.f32 %v59, 0.6931472
    %v61 = vmul.f32 -0.5, %v49
    %v62 = vadd.f32 %v61, 1.0
    %v63 = vmul.f32 %v62, %v49
    %v64 = vand.u32 2147483647, %v49
    %vm65 = vcmp.lt.f32.partialorder %v64, 0.0004427343
    %v66 = vsel %vm65, %v63, %v60
    %v67 = vadd.f32 %v51, 1.0
    %v68 = vlog2.pop %v67
    %v69 = vmul.f32 %v68, 0.6931472
    %v70 = vmul.f32 -0.5, %v51
    %v71 = vadd.f32 %v70, 1.0
    %v72 = vmul.f32 %v71, %v51
    %v73 = vand.u32 2147483647, %v51
    %vm74 = vcmp.lt.f32.partialorder %v73, 0.0004427343
    %v75 = vsel %vm74, %v72, %v69
    %v76 = vadd.f32 %v56, %v66
    %v77 = vadd.f32 %v57, %v75
    %vm78 = vcmp.ge.f32.partialorder %v40, 0.0
    %vm79 = vcmp.ge.f32.partialorder %v41, 0.0
    %v80 = vsel %vm78, 1.0, %v49
    %v81 = vsel %vm79, 1.0, %v51
    %v82 = vadd.f32 %v49, 1.0
    %v83 = vadd.f32 %v51, 1.0
    %v84 = vrcp.pop %v82
    %v85 = vrcp.pop %v83
    %v86 = vmul.f32 %v80, %v84
    %v87 = vmul.f32 %v81, %v85
    %v88 = vmul.f32 %v42, %v86
    %v89 = vmul.f32 %v43, %v87
    %v90 = vadd.f32 %v86, %v42
    %v91 = vadd.f32 %v87, %v43
    %v92 = vmul.f32 %v88, 2.0
    %v93 = vmul.f32 %v89, 2.0
    %v94 = vsub.f32 %v90, %v92
    %v95 = vsub.f32 %v91, %v93
    %v96 = vmul.f32 %v42, -0.5
    %v97 = vmul.f32 %v43, -0.5
    %v98 = vadd.f32 %v96, 0.75
    %v99 = vadd.f32 %v97, 0.75
    %v100 = vrsqrt.pop %v94
    %v101 = vmul.f32 %v94, %v100
    %vm102 = vcmp.eq.f32.partialorder %v94, inf
    %v103 = vsel %vm102, %v94, %v101
    %vm104 = vcmp.eq.f32.partialorder %v94, 0.0
    %v105 = vand.u32 %v94, 2147483648
    %v106 = vsel %vm104, %v105, %v103
    %v107 = vrsqrt.pop %v95
    %v108 = vmul.f32 %v95, %v107
    %vm109 = vcmp.eq.f32.partialorder %v95, inf
    %v110 = vsel %vm109, %v95, %v108
    %vm111 = vcmp.eq.f32.partialorder %v95, 0.0
    %v112 = vand.u32 %v95, 2147483648
    %v113 = vsel %vm111, %v112, %v110
    %v114 = vmul.f32 %v94, %v106
    %v115 = vmul.f32 %v95, %v113
    %v116 = vmul.f32 %v76, %v98
    %v117 = vmul.f32 %v77, %v99
    %v118 = vmul.f32 %v116, %v114
    %v119 = vmul.f32 %v117, %v115
    %v120 = vadd.f32 %v118, %v119
    %v121 = vadd.f32 %v120, 0.0
    %122 = vst [vmem:[#allocation7] sm:$0xff] %v121
    // Predicated region
    $region18: #{tpu_custom_call.1} parent=1 // pred_check
      _
    $region19: #{tpu_custom_call.1} parent=1 // pred_check_branch
      %124 = sbr.rel (0) target = $region21
    $region20: #{tpu_custom_call.1} parent=1 // pred_region
      %s126 = ssub.s32 128, 128
      %127 = vsyncadd [#allocation4], %s126
      %s129 = sshll.u32 [#allocation7], 4
      %s130 = int_to_ptr.vmem [resolvable:$true] %s129
      %132 = dma.vmem_to_hbm [thread:$0]  %s130, 128, %s2, [#allocation4]
    $region21: #{tpu_custom_call.1} parent=1 // pred_fallthru
      _
    // Predicated region
    $region22: #{tpu_custom_call.1} parent=1 // pred_check
      _
    $region23: #{tpu_custom_call.1} parent=1 // pred_check_branch
      %134 = sbr.rel (0) target = $region25
    $region24: #{tpu_custom_call.1} parent=1 // pred_region
      %135 = dma.done [#allocation4], 128
    $region25: #{tpu_custom_call.1} parent=1 // pred_fallthru
      _
    %136 = vsyncpa [#allocation3], 1
    %137 = vsyncpa [#allocation6], 1
    %138 = vsyncpa [#allocation4], 1

</llo_original>
